<compile_context>
chip_gen: v7x
topology: tpu7x:2x2x1
jax: 0.10.0
libtpu: 0.0.40
codegen_flags: <defaults>
</compile_context>

<pallas_src>
import jax
import jax.numpy as jnp
from jax.experimental import pallas as pl
from jax.experimental.pallas import tpu as pltpu

_LANE = 128
_MAX_BLOCK_BYTES = 4 * 1024 * 1024      # per-block cap; x4 (in+out, 2-deep) = 16 MiB
_VMEM_LIMIT_BYTES = 32 * 1024 * 1024    # safe scoped-VMEM limit on v5e/v6e/v7x


def _copy_kernel(x_ref, o_ref):
    # Identity copy of one (block_rows, W) tile — the only "compute" of a view.
    o_ref[...] = x_ref[...]


def _pallas_identity_copy_2d(x2d, block_rows):
    """Tiled VMEM identity copy of a lane-dense (R, W) slab."""
    R, W = x2d.shape
    assert W % _LANE == 0 and R % block_rows == 0
    return pl.pallas_call(
        _copy_kernel,
        out_shape=jax.ShapeDtypeStruct((R, W), x2d.dtype),
        grid=(R // block_rows,),
        in_specs=[pl.BlockSpec((block_rows, W), lambda i: (i, 0))],
        out_specs=pl.BlockSpec((block_rows, W), lambda i: (i, 0)),
        input_output_aliases={0: 0},     # donate input HBM buffer to the output
        compiler_params=pltpu.CompilerParams(
            dimension_semantics=("parallel",),
            vmem_limit_bytes=_VMEM_LIMIT_BYTES,
        ),
    )(x2d)


def _resolve_shape(total, shape):
    """torch.view semantics: resolve a single -1 and validate element count."""
    shape = list(shape)
    if shape.count(-1) > 1:
        raise ValueError("view(): only one dimension can be inferred")
    if -1 in shape:
        idx = shape.index(-1)
        known = 1
        for j, s in enumerate(shape):
            if j != idx:
                known *= s
        if known == 0 or total % known != 0:
            raise ValueError(
                f"view(): shape {tuple(shape)} is invalid for input of size {total}")
        shape[idx] = total // known
    out_total = 1
    for s in shape:
        out_total *= s
    if out_total != total:
        raise ValueError(
            f"view(): shape {tuple(shape)} is invalid for input of size {total}")
    return tuple(shape)


def _choose_tiling(total, itemsize):
    """Pick a lane-dense (R, W) slab and a block row count, or None to skip kernel."""
    # Widest lane-dense last dim (multiple of 128) that divides the element count.
    W = None
    for cand in (2048, 1024, 512, 256, 128):
        if total % cand == 0:
            W = cand
            break
    if W is None:
        return None                      # ragged element count: metadata reshape only
    R = total // W
    if R * W * itemsize <= _MAX_BLOCK_BYTES:
        return R, W, R                   # whole slab is one block (full-extent rows)
    max_rows = _MAX_BLOCK_BYTES // (W * itemsize)
    br = (max_rows // 8) * 8             # keep (8,128) divisibility on the block
    while br >= 8:
        if R % br == 0:
            return R, W, br
        br -= 8
    return None                          # no clean row tiling: metadata reshape only


def reshape_forward(x, shape):
    """Equivalent of Reshape(shape).forward(x) == x.view(shape)."""
    out_shape = _resolve_shape(x.size, shape)
    flat = x.reshape(-1)                 # row-major flatten (metadata only)
    tiling = _choose_tiling(x.size, x.dtype.itemsize)
    if tiling is None:
        # Pure view: reshape is metadata-only, no kernel needed.
        return flat.reshape(out_shape)
    R, W, block_rows = tiling
    y2d = _pallas_identity_copy_2d(flat.reshape(R, W), block_rows)
    return y2d.reshape(out_shape)


if __name__ == "__main__":
    key = jax.random.PRNGKey(0)
    # Small NCHW-style input, as the VAE uses Reshape to flatten conv features.
    x = jax.random.normal(key, (2, 4, 16, 16), dtype=jnp.float32)

    target_shape = (2, -1)               # Reshape((2, -1)): flatten per-sample features
    y = reshape_forward(x, target_shape)
    y = jax.block_until_ready(y)

    # Verify against plain row-major reshape (== torch .view on contiguous).
    ref = x.reshape(2, -1)
    assert y.shape == (2, 4 * 16 * 16)
    assert y.dtype == x.dtype
    assert jnp.array_equal(y, ref)

    print("KERNEL_OK")
</pallas_src>

<mosaic_0001>
module attributes {stable_mosaic.version = 11 : i64} {
  func.func @_copy_kernel(%arg0: i32, %arg1: memref<1x2048xf32, #tpu.memory_space<vmem>>, %arg2: memref<1x2048xf32, #tpu.memory_space<vmem>>) attributes {dimension_semantics = [#tpu.dimension_semantics<parallel>], iteration_bounds = array<i64: 1>, scalar_prefetch = 0 : i64, scratch_operands = 0 : i64, tpu.core_type = #tpu.core_type<tc>, window_params = [{transform_indices = @transform_0, window_bounds = array<i64: 1, 2048>}, {transform_indices = @transform_1, window_bounds = array<i64: 1, 2048>}]} {
    %c0 = arith.constant 0 : index
    %c0_0 = arith.constant 0 : index
    %0 = vector.load %arg1[%c0, %c0_0] : memref<1x2048xf32, #tpu.memory_space<vmem>>, vector<1x2048xf32>
    %c0_1 = arith.constant 0 : index
    %c0_2 = arith.constant 0 : index
    %1 = vector.load %arg2[%c0_1, %c0_2] : memref<1x2048xf32, #tpu.memory_space<vmem>>, vector<1x2048xf32>
    tpu.vector_store %arg2[%c0_1, %c0_2], %0 {strides = array<i32>} : memref<1x2048xf32, #tpu.memory_space<vmem>>, vector<1x2048xf32>,
    return
  }
  func.func @transform_0(%arg0: i32) -> (i32, i32) {
    %c0_i32 = arith.constant 0 : i32
    %c0_i32_0 = arith.constant 0 : i32
    return %arg0, %c0_i32 : i32, i32
  }
  func.func @transform_1(%arg0: i32) -> (i32, i32) {
    %c0_i32 = arith.constant 0 : i32
    %c0_i32_0 = arith.constant 0 : i32
    return %arg0, %c0_i32 : i32, i32
  }
}

</mosaic_0001>

<llo_original>
// kernel: tpu_custom_call.1
$region0: #{tpu_custom_call.1}
  #allocation0 [shape = 'u32[]', space=smem, size = 0x4, offset = 0x4, fixed_abs, tag = 'smem constant byte address 0x4 - core index']
  #allocation1 [shape = 'u32[144,128]{1,0:T(1,128)}', space=vmem, size = 0x12000, scoped, tag = 'internal scratch']
  %s0 = inlined_call_operand.hbm [shape: f32[1,2048], index: 0, kind: input, shape index: {}, may-alias: {0,1}]
  %s1 = inlined_call_operand.hbm [shape: f32[1,2048], index: 1, kind: output, shape index: {}, may-alias: {0,1}]
  %s2 = sld [smem:[#allocation0]]
  $region18: #{tpu_custom_call.1} parent=0
    _
  %s4 = ssub.s32 1, %s2
  %s5 = scalar_select 0, %s4, %s2
  $region1: #{tpu_custom_call.1} parent=0
    #allocation2 [shape = 'u8[8192]{0}', space=vmem, size = 0x2000, scoped, tag = 'input window, operand 0, single buffered']
    #allocation3 [shape = 's32[1]{0}', space=sflag, size = 0x4, scoped, tag = 'scoped memory for tpu_custom_call.1']
    #allocation4 [shape = 's32[1]{0}', space=sflag, size = 0x4, scoped, tag = 'scoped memory for tpu_custom_call.1']
    #allocation5 [shape = 'u8[8192]{0}', space=vmem, size = 0x2000, scoped, tag = 'output window, operand 0, single buffered']
    %6 = vsyncpa [#allocation3], 0
    %7 = vsyncpa [#allocation4], 0
    // Predicated region
    $region2: #{tpu_custom_call.1} parent=1 // pred_check
      _
    $region3: #{tpu_custom_call.1} parent=1 // pred_check_branch
      %9 = sbr.rel (0) target = $region5
    $region4: #{tpu_custom_call.1} parent=1 // pred_region
      %s11 = ssub.s32 256, 256
      %12 = vsyncadd [#allocation3], %s11
      %s14 = sshll.u32 [#allocation2], 4
      %s15 = int_to_ptr.vmem [resolvable:$true] %s14
      %17 = dma.hbm_to_vmem [thread:$0]  %s0, 256, %s15, [#allocation3]
    $region5: #{tpu_custom_call.1} parent=1 // pred_fallthru
      _
    // Predicated region
    $region6: #{tpu_custom_call.1} parent=1 // pred_check
      _
    $region7: #{tpu_custom_call.1} parent=1 // pred_check_branch
      %19 = sbr.rel (0) target = $region9
    $region8: #{tpu_custom_call.1} parent=1 // pred_region
      %20 = dma.done [#allocation3], 256
    $region9: #{tpu_custom_call.1} parent=1 // pred_fallthru
      _
    %v21 = vld [vmem:[#allocation2] sm:$0xff]
    %v22 = vld [vmem:[#allocation2 + $0x8] sm:$0xff]
    %23 = vst [vmem:[#allocation5] sm:$0xff] %v21
    %24 = vst [vmem:[#allocation5 + $0x8] sm:$0xff] %v22
    // Predicated region
    $region10: #{tpu_custom_call.1} parent=1 // pred_check
      _
    $region11: #{tpu_custom_call.1} parent=1 // pred_check_branch
      %26 = sbr.rel (0) target = $region13
    $region12: #{tpu_custom_call.1} parent=1 // pred_region
      %s28 = ssub.s32 256, 256
      %29 = vsyncadd [#allocation4], %s28
      %s31 = sshll.u32 [#allocation5], 4
      %s32 = int_to_ptr.vmem [resolvable:$true] %s31
      %34 = dma.vmem_to_hbm [thread:$0]  %s32, 256, %s1, [#allocation4]
    $region13: #{tpu_custom_call.1} parent=1 // pred_fallthru
      _
    // Predicated region
    $region14: #{tpu_custom_call.1} parent=1 // pred_check
      _
    $region15: #{tpu_custom_call.1} parent=1 // pred_check_branch
      %36 = sbr.rel (0) target = $region17
    $region16: #{tpu_custom_call.1} parent=1 // pred_region
      %37 = dma.done [#allocation4], 256
    $region17: #{tpu_custom_call.1} parent=1 // pred_fallthru
      _
    %38 = vsyncpa [#allocation3], 1
    %39 = vsyncpa [#allocation4], 1

</llo_original>
